<compile_context>
chip_gen: v7x
topology: tpu7x:2x2x1
jax: 0.10.0
libtpu: 0.0.40
codegen_flags: <defaults>
</compile_context>

<pallas_src>
import functools
import math

import jax
import jax.numpy as jnp
from jax.experimental import pallas as pl
from jax.experimental.pallas import tpu as pltpu


def _round_up(x, m):
    return (x + m - 1) // m * m


def _split_dim(total, cap, align):
    """Near-divisor split: (tile, n_tiles) with tile % align == 0, tile <= ~cap,
    and total padding kept < align (avoids up-to-2x zero-block waste)."""
    total_a = _round_up(total, align)
    if total_a <= cap:
        return total_a, 1
    n = -(-total_a // cap)                       # ceil
    tile = _round_up(-(-total_a // n), align)
    n = -(-total_a // tile)
    return tile, n


def _vmem_capacity_bytes():
    try:
        return int(pltpu.get_tpu_info().vmem_capacity_bytes)
    except Exception:
        return 64 * 1024 * 1024                  # v7x physical VMEM (smallest gen)


# --------------------------------------------------------------------------
# Kernels
# --------------------------------------------------------------------------
def _gemm_bias_act_kernel(w_ref, p_ref, b_ref, o_ref, *, negative_slope,
                          apply_act):
    """Single-K fast path: whole contraction in one block, no scratch/pl.when."""
    out = jnp.dot(w_ref[...], p_ref[...], preferred_element_type=jnp.float32)
    out = out + b_ref[...]                       # (co_t, 1) broadcast, f32
    if apply_act:
        out = jnp.where(out >= 0, out, negative_slope * out)
    o_ref[...] = out.astype(o_ref.dtype)


def _gemm_bias_act_acc_kernel(w_ref, p_ref, b_ref, o_ref, acc_ref, *,
                              negative_slope, apply_act):
    """Multi-K path: grid axis 3 is the reduction, f32 VMEM accumulator."""
    k = pl.program_id(3)

    @pl.when(k == 0)
    def _():
        acc_ref[...] = jnp.zeros_like(acc_ref)

    acc_ref[...] += jnp.dot(w_ref[...], p_ref[...],
                            preferred_element_type=jnp.float32)

    @pl.when(k == pl.num_programs(3) - 1)
    def _():
        out = acc_ref[...] + b_ref[...]
        if apply_act:
            out = jnp.where(out >= 0, out, negative_slope * out)
        o_ref[...] = out.astype(o_ref.dtype)


# --------------------------------------------------------------------------
# Wrapper
# --------------------------------------------------------------------------
@functools.partial(
    jax.jit,
    static_argnames=("stride", "padding", "use_leaky_relu", "negative_slope",
                     "compute_dtype", "out_dtype"))
def conv_block(x, weight, bias, *, stride=2, padding=1, use_leaky_relu=True,
               negative_slope=0.2, compute_dtype=jnp.bfloat16, out_dtype=None):
    """ConvBlock forward: Conv2d(C_in, C_out, k, stride, padding) [+ LeakyReLU(0.2)].

    x: (N, C_in, H, W) NCHW; weight: (C_out, C_in, KH, KW) OIHW; bias: (C_out,).
    compute_dtype=jnp.float32 is the high-accuracy escape hatch (bf16 default
    hits the MXU fast path on v6e/v7x).
    """
    n, c_in, h, w = x.shape
    c_out, c_in_w, kh, kw = weight.shape
    assert c_in == c_in_w
    if out_dtype is None:
        out_dtype = x.dtype

    h_out = (h + 2 * padding - kh) // stride + 1
    w_out = (w + 2 * padding - kw) // stride + 1
    hw = h_out * w_out
    k_dim = c_in * kh * kw

    # ---- wrapper-side im2col: one fused cast+pad+gather producer -----------
    # Batch stays leading -> NO transpose of the 4x-input patches array and
    # NO output transpose at the end.
    x_pad = jnp.pad(x.astype(compute_dtype),
                    ((0, 0), (0, 0), (padding, padding), (padding, padding)))
    cols = []
    for i in range(kh):
        for j in range(kw):
            cols.append(x_pad[:, :,
                              i:i + stride * (h_out - 1) + 1:stride,
                              j:j + stride * (w_out - 1) + 1:stride])
    # (N, C_in, KH*KW, H_out, W_out) -> (N, K, HW), K index = c*(KH*KW) + tap,
    # matching weight.reshape(C_out, K).
    patches = jnp.stack(cols, axis=2).reshape(n, k_dim, hw)

    # ---- tiling (near-divisor splits; 16-row alignment for bf16 packing) ---
    sub_align = 16 if jnp.dtype(compute_dtype).itemsize < 4 else 8
    co_t, n_co = _split_dim(c_out, 256, sub_align)
    m_t, n_m = _split_dim(hw, 1024, 128)
    if k_dim <= 4096:
        k_t, n_k = _round_up(k_dim, sub_align), 1      # single-K fast path
    else:
        k_t, n_k = _split_dim(k_dim, 2048, 128)
    co_pad, hw_pad, k_pad = n_co * co_t, n_m * m_t, n_k * k_t

    w_mat = jnp.pad(weight.reshape(c_out, k_dim).astype(compute_dtype),
                    ((0, co_pad - c_out), (0, k_pad - k_dim)))
    p_mat = jnp.pad(patches, ((0, 0), (0, k_pad - k_dim), (0, hw_pad - hw)))
    b_mat = jnp.pad(bias.astype(jnp.float32),
                    (0, co_pad - c_out)).reshape(co_pad, 1)

    # ---- cost estimate & generation-aware VMEM limit ------------------------
    csize = jnp.dtype(compute_dtype).itemsize
    osize = jnp.dtype(out_dtype).itemsize
    cost = pl.CostEstimate(
        flops=2 * n * c_out * k_dim * hw,
        transcendentals=0,
        bytes_accessed=int(w_mat.size * csize + p_mat.size * csize
                           + b_mat.size * 4 + n * co_pad * hw_pad * osize))

    block_bytes = ((co_t * k_t + k_t * m_t) * csize
                   + co_t * m_t * osize + co_t * 4)
    acc_bytes = co_t * m_t * 4 if n_k > 1 else 0
    cap = _vmem_capacity_bytes()
    upper = max(cap - (8 << 20), 16 * 1024 * 1024)
    vmem_limit = int(min(max(4 * block_bytes + acc_bytes + (2 << 20),
                             16 * 1024 * 1024), upper))

    slope = float(negative_slope)
    apply_act = bool(use_leaky_relu)

    if n_k == 1:
        kernel = functools.partial(_gemm_bias_act_kernel,
                                   negative_slope=slope, apply_act=apply_act)
        grid = (n, n_co, n_m)
        in_specs = [
            pl.BlockSpec((co_t, k_t), lambda b, i, j: (i, 0)),                 # W
            pl.BlockSpec((pl.Squeezed(), k_t, m_t), lambda b, i, j: (b, 0, j)),  # P
            pl.BlockSpec((co_t, 1), lambda b, i, j: (i, 0)),                   # bias
        ]
        out_specs = pl.BlockSpec((pl.Squeezed(), co_t, m_t),
                                 lambda b, i, j: (b, i, j))
        scratch_shapes = []
        dim_sem = ("parallel", "parallel", "parallel")
    else:
        kernel = functools.partial(_gemm_bias_act_acc_kernel,
                                   negative_slope=slope, apply_act=apply_act)
        grid = (n, n_co, n_m, n_k)
        in_specs = [
            pl.BlockSpec((co_t, k_t), lambda b, i, j, k: (i, k)),
            pl.BlockSpec((pl.Squeezed(), k_t, m_t), lambda b, i, j, k: (b, k, j)),
            pl.BlockSpec((co_t, 1), lambda b, i, j, k: (i, 0)),
        ]
        out_specs = pl.BlockSpec((pl.Squeezed(), co_t, m_t),
                                 lambda b, i, j, k: (b, i, j))
        scratch_shapes = [pltpu.VMEM((co_t, m_t), jnp.float32)]
        dim_sem = ("parallel", "parallel", "parallel", "arbitrary")

    out = pl.pallas_call(
        kernel,
        out_shape=jax.ShapeDtypeStruct((n, co_pad, hw_pad), out_dtype),
        grid=grid,
        in_specs=in_specs,
        out_specs=out_specs,
        scratch_shapes=scratch_shapes,
        compiler_params=pltpu.CompilerParams(
            dimension_semantics=dim_sem,
            vmem_limit_bytes=vmem_limit),
        cost_estimate=cost,
    )(w_mat, p_mat, b_mat)

    # Restore NCHW: plain slice + reshape, no transpose.
    return out[:, :c_out, :hw].reshape(n, c_out, h_out, w_out)


if __name__ == "__main__":
    key = jax.random.PRNGKey(0)
    k_x, k_w, k_b = jax.random.split(key, 3)

    # Small shapes consistent with the module: in_channels=4, out_channels=8.
    N, C_in, H, W = 2, 4, 16, 16
    C_out, K = 8, 4

    x = jax.random.normal(k_x, (N, C_in, H, W), jnp.float32)
    fan_in = C_in * K * K
    bound = 1.0 / math.sqrt(fan_in)
    weight = jax.random.uniform(k_w, (C_out, C_in, K, K), jnp.float32,
                                -bound, bound)
    bias = jax.random.uniform(k_b, (C_out,), jnp.float32, -bound, bound)

    # Pure-JAX reference.
    ref = jax.lax.conv_general_dilated(
        x, weight, window_strides=(2, 2), padding=((1, 1), (1, 1)),
        dimension_numbers=("NCHW", "OIHW", "NCHW"))
    ref = ref + bias[None, :, None, None]
    ref = jnp.where(ref >= 0, ref, 0.2 * ref)

    # f32 compute path: strict correctness check.
    out_f32 = jax.block_until_ready(
        conv_block(x, weight, bias, compute_dtype=jnp.float32))
    assert out_f32.shape == (N, C_out, H // 2, W // 2), out_f32.shape
    assert jnp.allclose(out_f32, ref, atol=1e-4, rtol=1e-4), \
        float(jnp.max(jnp.abs(out_f32 - ref)))

    # bf16 compute path (default; MXU fast path on v6e/v7x): loose check.
    out_bf16 = jax.block_until_ready(conv_block(x, weight, bias))
    assert out_bf16.shape == (N, C_out, H // 2, W // 2), out_bf16.shape
    assert jnp.allclose(out_bf16, ref, atol=5e-2), \
        float(jnp.max(jnp.abs(out_bf16 - ref)))

    # No-activation path (use_leaky_relu=False skips the VPU where entirely).
    ref_lin = jax.lax.conv_general_dilated(
        x, weight, window_strides=(2, 2), padding=((1, 1), (1, 1)),
        dimension_numbers=("NCHW", "OIHW", "NCHW")) + bias[None, :, None, None]
    out_lin = jax.block_until_ready(
        conv_block(x, weight, bias, use_leaky_relu=False,
                   compute_dtype=jnp.float32))
    assert jnp.allclose(out_lin, ref_lin, atol=1e-4, rtol=1e-4), \
        float(jnp.max(jnp.abs(out_lin - ref_lin)))

    print("KERNEL_OK")
</pallas_src>

<mosaic_0001>
module attributes {stable_mosaic.version = 11 : i64} {
  func.func @_gemm_bias_act_kernel(%arg0: i32, %arg1: i32, %arg2: i32, %arg3: memref<8x64xf32, #tpu.memory_space<vmem>>, %arg4: memref<1x64x128xf32, #tpu.memory_space<vmem>>, %arg5: memref<8x1xf32, #tpu.memory_space<vmem>>, %arg6: memref<1x8x128xf32, #tpu.memory_space<vmem>>) attributes {dimension_semantics = [#tpu.dimension_semantics<parallel>, #tpu.dimension_semantics<parallel>, #tpu.dimension_semantics<parallel>], iteration_bounds = array<i64: 2, 1, 1>, scalar_prefetch = 0 : i64, scratch_operands = 0 : i64, tpu.core_type = #tpu.core_type<tc>, window_params = [{transform_indices = @transform_0, window_bounds = array<i64: 8, 64>}, {transform_indices = @transform_1, window_bounds = array<i64: 1, 64, 128>}, {transform_indices = @transform_2, window_bounds = array<i64: 8, 1>}, {transform_indices = @transform_3, window_bounds = array<i64: 1, 8, 128>}]} {
    %c0 = arith.constant 0 : index
    %c0_0 = arith.constant 0 : index
    %0 = vector.load %arg3[%c0, %c0_0] : memref<8x64xf32, #tpu.memory_space<vmem>>, vector<8x64xf32>
    %c0_1 = arith.constant 0 : index
    %c0_2 = arith.constant 0 : index
    %c0_3 = arith.constant 0 : index
    %1 = vector.load %arg4[%c0_1, %c0_2, %c0_3] : memref<1x64x128xf32, #tpu.memory_space<vmem>>, vector<1x64x128xf32>
    %2 = vector.shape_cast %1 : vector<1x64x128xf32> to vector<64x128xf32>
    %cst = arith.constant dense<0.000000e+00> : vector<8x128xf32>
    %3 = tpu.matmul %0, %2, %cst {dimension_numbers = #tpu.dot_dimension_numbers<[1], [0], [0], [1], [0, 0, 1, 1], [], []>} : vector<8x64xf32>, vector<64x128xf32>, vector<8x128xf32> -> vector<8x128xf32>
    %c0_4 = arith.constant 0 : index
    %c0_5 = arith.constant 0 : index
    %4 = vector.load %arg5[%c0_4, %c0_5] : memref<8x1xf32, #tpu.memory_space<vmem>>, vector<8x1xf32>
    %5 = vector.broadcast %4 : vector<8x1xf32> to vector<8x128xf32>
    %6 = arith.addf %3, %5 : vector<8x128xf32>
    %cst_6 = arith.constant 0.000000e+00 : f32
    %7 = vector.broadcast %cst_6 : f32 to vector<8x128xf32>
    %8 = arith.cmpf oge, %6, %7 : vector<8x128xf32>
    %cst_7 = arith.constant 2.000000e-01 : f32
    %9 = vector.broadcast %cst_7 : f32 to vector<8x128xf32>
    %10 = arith.mulf %9, %6 : vector<8x128xf32>
    %11 = arith.select %8, %6, %10 : vector<8x128xi1>, vector<8x128xf32>
    %c0_8 = arith.constant 0 : index
    %c0_9 = arith.constant 0 : index
    %c0_10 = arith.constant 0 : index
    %12 = vector.load %arg6[%c0_8, %c0_9, %c0_10] : memref<1x8x128xf32, #tpu.memory_space<vmem>>, vector<1x8x128xf32>
    %13 = vector.shape_cast %12 : vector<1x8x128xf32> to vector<8x128xf32>
    %14 = vector.shape_cast %11 : vector<8x128xf32> to vector<1x8x128xf32>
    tpu.vector_store %arg6[%c0_8, %c0_9, %c0_10], %14 {strides = array<i32>} : memref<1x8x128xf32, #tpu.memory_space<vmem>>, vector<1x8x128xf32>,
    return
  }
  func.func @transform_0(%arg0: i32, %arg1: i32, %arg2: i32) -> (i32, i32) {
    %c0_i32 = arith.constant 0 : i32
    %c0_i32_0 = arith.constant 0 : i32
    return %arg1, %c0_i32 : i32, i32
  }
  func.func @transform_1(%arg0: i32, %arg1: i32, %arg2: i32) -> (i32, i32, i32) {
    %c0_i32 = arith.constant 0 : i32
    %c0_i32_0 = arith.constant 0 : i32
    return %arg0, %c0_i32, %arg2 : i32, i32, i32
  }
  func.func @transform_2(%arg0: i32, %arg1: i32, %arg2: i32) -> (i32, i32) {
    %c0_i32 = arith.constant 0 : i32
    %c0_i32_0 = arith.constant 0 : i32
    return %arg1, %c0_i32 : i32, i32
  }
  func.func @transform_3(%arg0: i32, %arg1: i32, %arg2: i32) -> (i32, i32, i32) {
    %c0_i32 = arith.constant 0 : i32
    return %arg0, %arg1, %arg2 : i32, i32, i32
  }
}

</mosaic_0001>

<llo_original>
// kernel: conv_block.1
$region0: #{conv_block.1}
  #allocation0 [shape = 'u32[]', space=smem, size = 0x4, offset = 0x4, fixed_abs, tag = 'smem constant byte address 0x4 - core index']
  #allocation1 [shape = 'u32[144,128]{1,0:T(1,128)}', space=vmem, size = 0x12000, scoped, tag = 'internal scratch']
  %s0 = inlined_call_operand.vmem [shape: f32[8,64], index: 0, kind: input, shape index: {}]
  %s1 = inlined_call_operand.vmem [shape: f32[2,64,128], index: 1, kind: input, shape index: {}]
  %s2 = inlined_call_operand.vmem [shape: f32[8,1], index: 2, kind: input, shape index: {}]
  %s3 = inlined_call_operand.vmem [shape: f32[2,8,128], index: 3, kind: output, shape index: {}]
  %s4 = sld [smem:[#allocation0]]
  $region45: #{conv_block.1} parent=0
    _
  %s6 = ssub.s32 1, %s4
  %s7 = scalar_select 0, %s6, %s4
  loop: start=0, step=1, limit=4
  $region2: #{conv_block.1} parent=0 // loop_pre_header
    _
  $region3: #{conv_block.1} parent=0 // loop_header
    %s9 = sphi 0, %s13
    %p10 = scmp.ge.s32.totalorder %s9, 4
    %s16 = sphi 0, %s35
    %s17 = sphi 0, %s31
    %s18 = sphi 0, %s27
    %s19 = sphi 0, %s16
    %s20 = sphi 0, %s17
    %s21 = sphi 0, %s18
    %s22 = sphi 0, %s19
    %s23 = sphi 0, %s20
    %s24 = sphi 0, %s21
    %s38 = sphi 0, %s40
    %s41 = sphi 0, %s38
    %s42 = sphi 0, %s41
    %s58 = sphi 0, %s42
    %s66 = sphi 0, %s68
    %s69 = sphi 0, %s66
    %s70 = sphi 0, %s69
    %s86 = sphi 0, %s70
    %s92 = sphi 0, %s94
    %s95 = sphi 0, %s92
    %s96 = sphi 0, %s95
    %s112 = sphi 0, %s96
    %s122 = sphi 0, %s124
    %s125 = sphi 0, %s122
    %s126 = sphi 0, %s125
    %s142 = sphi 0, %s126
  $region4: #{conv_block.1} parent=0 // loop_header_branch
    %12 = sbr.rel (%p10) target = $region8
  $region5: #{conv_block.1} parent=0 // loop_body
    %s14 = ssub.s32 %s9, 1
    %s15 = ssub.s32 %s9, 2
    %s25 = sadd.s32 1, %s18
    %p26 = scmp.ge.s32.totalorder %s25, 1
    %s27 = scalar_select %p26, 0, %s25
    %s28 = sadd.s32 1, %s17
    %s29 = scalar_select %p26, %s28, %s17
    %p30 = scmp.ge.s32.totalorder %s29, 1
    %s31 = scalar_select %p30, 0, %s29
    %s32 = sadd.s32 1, %s16
    %s33 = scalar_select %p30, %s32, %s16
    %p34 = scmp.ge.s32.totalorder %s33, 2
    %s35 = scalar_select %p34, 0, %s33
    %s36 = ssub.s32 %s17, %s31
    %p37 = scmp.eq.s32.totalorder %s36, 0
    %s39 = sadd.s32 %s38, 1
    %s40 = scalar_select %p37, %s38, %s39
    %p43 = pneg %p37
    %p44 = scmp.eq.s32.totalorder %s9, 1
    %p45 = por %p43, %p44
    %p46 = scmp.ne.s32.totalorder %s38, %s41
    %p47 = scmp.eq.s32.totalorder %s9, 0
    %p48 = por %p46, %p47
    %p49 = scmp.ne.s32.totalorder %s38, %s41
    %p50 = scmp.eq.s32.totalorder %s14, 1
    %p51 = por %p49, %p50
    %p52 = scmp.ne.s32.totalorder %s41, %s42
    %p53 = scmp.eq.s32.totalorder %s14, 0
    %p54 = por %p52, %p53
    %p55 = scmp.ne.s32.totalorder %s41, %s42
    %p56 = scmp.eq.s32.totalorder %s15, 1
    %p57 = por %p55, %p56
    %p59 = scmp.ne.s32.totalorder %s42, %s58
    %p60 = scmp.eq.s32.totalorder %s15, 0
    %p61 = por %p59, %p60
    %s62 = ssub.s32 %s16, %s35
    %s63 = ssub.s32 %s18, %s27
    %s64 = sor.u32 %s62, %s63
    %p65 = scmp.eq.s32.totalorder %s64, 0
    %s67 = sadd.s32 %s66, 1
    %s68 = scalar_select %p65, %s66, %s67
    %p71 = pneg %p65
    %p72 = scmp.eq.s32.totalorder %s9, 1
    %p73 = por %p71, %p72
    %p74 = scmp.ne.s32.totalorder %s66, %s69
    %p75 = scmp.eq.s32.totalorder %s9, 0
    %p76 = por %p74, %p75
    %p77 = scmp.ne.s32.totalorder %s66, %s69
    %p78 = scmp.eq.s32.totalorder %s14, 1
    %p79 = por %p77, %p78
    %p80 = scmp.ne.s32.totalorder %s69, %s70
    %p81 = scmp.eq.s32.totalorder %s14, 0
    %p82 = por %p80, %p81
    %p83 = scmp.ne.s32.totalorder %s69, %s70
    %p84 = scmp.eq.s32.totalorder %s15, 1
    %p85 = por %p83, %p84
    %p87 = scmp.ne.s32.totalorder %s70, %s86
    %p88 = scmp.eq.s32.totalorder %s15, 0
    %p89 = por %p87, %p88
    %s90 = ssub.s32 %s17, %s31
    %p91 = scmp.eq.s32.totalorder %s90, 0
    %s93 = sadd.s32 %s92, 1
    %s94 = scalar_select %p91, %s92, %s93
    %p97 = pneg %p91
    %p98 = scmp.eq.s32.totalorder %s9, 1
    %p99 = por %p97, %p98
    %p100 = scmp.ne.s32.totalorder %s92, %s95
    %p101 = scmp.eq.s32.totalorder %s9, 0
    %p102 = por %p100, %p101
    %p103 = scmp.ne.s32.totalorder %s92, %s95
    %p104 = scmp.eq.s32.totalorder %s14, 1
    %p105 = por %p103, %p104
    %p106 = scmp.ne.s32.totalorder %s95, %s96
    %p107 = scmp.eq.s32.totalorder %s14, 0
    %p108 = por %p106, %p107
    %p109 = scmp.ne.s32.totalorder %s95, %s96
    %p110 = scmp.eq.s32.totalorder %s15, 1
    %p111 = por %p109, %p110
    %p113 = scmp.ne.s32.totalorder %s96, %s112
    %p114 = scmp.eq.s32.totalorder %s15, 0
    %p115 = por %p113, %p114
    %s116 = ssub.s32 %s16, %s35
    %s117 = ssub.s32 %s17, %s31
    %s118 = sor.u32 %s116, %s117
    %s119 = ssub.s32 %s18, %s27
    %s120 = sor.u32 %s118, %s119
    %p121 = scmp.eq.s32.totalorder %s120, 0
    %s123 = sadd.s32 %s122, 1
    %s124 = scalar_select %p121, %s122, %s123
    %p127 = pneg %p121
    %p128 = scmp.eq.s32.totalorder %s9, 1
    %p129 = por %p127, %p128
    %p130 = scmp.ne.s32.totalorder %s122, %s125
    %p131 = scmp.eq.s32.totalorder %s9, 0
    %p132 = por %p130, %p131
    %p133 = scmp.ne.s32.totalorder %s122, %s125
    %p134 = scmp.eq.s32.totalorder %s14, 1
    %p135 = por %p133, %p134
    %p136 = scmp.ne.s32.totalorder %s125, %s126
    %p137 = scmp.eq.s32.totalorder %s14, 0
    %p138 = por %p136, %p137
    %p139 = scmp.ne.s32.totalorder %s125, %s126
    %p140 = scmp.eq.s32.totalorder %s15, 1
    %p141 = por %p139, %p140
    %p143 = scmp.ne.s32.totalorder %s126, %s142
    %p144 = scmp.eq.s32.totalorder %s15, 0
    %p145 = por %p143, %p144
    %p146 = scmp.le.s32.totalorder 1, %s9
    %p147 = scmp.lt.s32.totalorder %s9, 3
    %p148 = pnand %p146, %p147
    %p149 = pneg %p148
    // Predicated region
    $region9: #{conv_block.1} parent=5 // pred_check
      _
    $region10: #{conv_block.1} parent=5 // pred_check_branch
      %151 = sbr.rel (%p148) target = $region12
    $region11: #{conv_block.1} parent=5 // pred_region
      %s152 = ssub.s32 %s9, 1
      // Predicated region
      $region13: #{conv_block.1} parent=11 // pred_check
        %p153 = pneg %p54
      $region14: #{conv_block.1} parent=11 // pred_check_branch
        %155 = sbr.rel (%p153) target = $region16
      $region15: #{conv_block.1} parent=11 // pred_region
        %p156 = scmp.lt.s32.totalorder %s20, 0
        %s157 = scalar_select %p156, %s20, 0
        %s158 = smul.addr %s157, 8
        %s159 = scalar_lea.vmem %s0, %s158
      $region16: #{conv_block.1} parent=11 // pred_fallthru
        _
      // Predicated region
      $region17: #{conv_block.1} parent=11 // pred_check
        %p160 = pneg %p108
      $region18: #{conv_block.1} parent=11 // pred_check_branch
        %162 = sbr.rel (%p160) target = $region20
      $region19: #{conv_block.1} parent=11 // pred_region
        %p163 = scmp.lt.s32.totalorder %s20, 0
        %s164 = scalar_select %p163, %s20, 0
        %s165 = smul.addr %s164, 8
        %s166 = scalar_lea.vmem %s2, %s165
      $region20: #{conv_block.1} parent=11 // pred_fallthru
        _
    $region12: #{conv_block.1} parent=5 // pred_fallthru
      _
    %p167 = scmp.lt.s32.totalorder %s9, 2
    // Predicated region
    $region21: #{conv_block.1} parent=5 // pred_check
      %p168 = pneg %p167
    $region22: #{conv_block.1} parent=5 // pred_check_branch
      %170 = sbr.rel (%p168) target = $region24
    $region23: #{conv_block.1} parent=5 // pred_region
      // Predicated region
      $region25: #{conv_block.1} parent=23 // pred_check
        %p171 = pneg %p76
      $region26: #{conv_block.1} parent=23 // pred_check_branch
        %173 = sbr.rel (%p171) target = $region28
      $region27: #{conv_block.1} parent=23 // pred_region
        %p174 = scmp.lt.s32.totalorder %s16, 1
        %s175 = scalar_select %p174, %s16, 1
        %p176 = scmp.lt.s32.totalorder %s18, 0
        %s177 = scalar_select %p176, %s18, 0
        %s178 = smul.addr %s175, 8
        %s179 = sadd.s32 %s177, %s178
        %s180 = smul.addr %s179, 8
        %s181 = scalar_lea.vmem %s1, %s180
      $region28: #{conv_block.1} parent=23 // pred_fallthru
        _
    $region24: #{conv_block.1} parent=5 // pred_fallthru
      _
    %p182 = scmp.le.s32.totalorder 1, %s9
    %p183 = scmp.lt.s32.totalorder %s9, 3
    %p184 = pnand %p182, %p183
    %p185 = pneg %p184
    // Predicated region
    $region29: #{conv_block.1} parent=5 // pred_check
      _
    $region30: #{conv_block.1} parent=5 // pred_check_branch
      %187 = sbr.rel (%p184) target = $region32
    $region31: #{conv_block.1} parent=5 // pred_region
      %s188 = ssub.s32 %s9, 1
      %p189 = scmp.lt.s32.totalorder %s20, 0
      %s190 = scalar_select %p189, %s20, 0
      %s191 = smul.addr %s190, 8
      %s192 = scalar_lea.vmem %s0, %s191
      %p193 = pneg %p54
      %p194 = pneg %p51
      %p195 = scmp.lt.s32.totalorder %s19, 1
      %s196 = scalar_select %p195, %s19, 1
      %p197 = scmp.lt.s32.totalorder %s21, 0
      %s198 = scalar_select %p197, %s21, 0
      %s199 = smul.addr %s196, 8
      %s200 = sadd.s32 %s198, %s199
      %s201 = smul.addr %s200, 8
      %s202 = scalar_lea.vmem %s1, %s201
      %p203 = pneg %p82
      %p204 = pneg %p79
      %p205 = scmp.lt.s32.totalorder %s20, 0
      %s206 = scalar_select %p205, %s20, 0
      %s207 = smul.addr %s206, 8
      %s208 = scalar_lea.vmem %s2, %s207
      %p209 = pneg %p108
      %p210 = pneg %p105
      %p211 = pneg %p138
      %p212 = pneg %p135
      %p213 = scmp.lt.s32.totalorder %s19, 1
      %s214 = scalar_select %p213, %s19, 1
      %p215 = scmp.lt.s32.totalorder %s20, 0
      %s216 = scalar_select %p215, %s20, 0
      %p217 = scmp.lt.s32.totalorder %s21, 0
      %s218 = scalar_select %p217, %s21, 0
      %s219 = sadd.s32 %s218, %s216
      %s220 = sadd.s32 %s219, %s214
      %s221 = smul.addr %s220, 8
      %s222 = scalar_lea.vmem %s3, %s221
      %p223 = scmp.lt.s32.totalorder %s20, 0
      %s224 = scalar_select %p223, %s20, 0
      %s225 = smul.addr %s224, 8
      %s226 = scalar_lea.vmem %s0, %s225
      %p227 = scmp.lt.s32.totalorder %s19, 1
      %s228 = scalar_select %p227, %s19, 1
      %p229 = scmp.lt.s32.totalorder %s21, 0
      %s230 = scalar_select %p229, %s21, 0
      %s231 = smul.addr %s228, 8
      %s232 = sadd.s32 %s230, %s231
      %s233 = smul.addr %s232, 8
      %s234 = scalar_lea.vmem %s1, %s233
      %p235 = scmp.lt.s32.totalorder %s20, 0
      %s236 = scalar_select %p235, %s20, 0
      %s237 = smul.addr %s236, 8
      %s238 = scalar_lea.vmem %s2, %s237
      %p239 = scmp.lt.s32.totalorder %s19, 1
      %s240 = scalar_select %p239, %s19, 1
      %p241 = scmp.lt.s32.totalorder %s20, 0
      %s242 = scalar_select %p241, %s20, 0
      %p243 = scmp.lt.s32.totalorder %s21, 0
      %s244 = scalar_select %p243, %s21, 0
      %s245 = sadd.s32 %s244, %s242
      %s246 = sadd.s32 %s245, %s240
      %s247 = smul.addr %s246, 8
      %s248 = scalar_lea.vmem %s3, %s247
      %v249 = vld [vmem:[%s226] sm:$0xff]
      %v250 = vld [vmem:[%s234] sm:$0xff]
      %v251 = vld [vmem:[%s234 + $0x8] sm:$0xff]
      %v252 = vld [vmem:[%s234 + $0x10] sm:$0xff]
      %v253 = vld [vmem:[%s234 + $0x18] sm:$0xff]
      %v254 = vld [vmem:[%s234 + $0x20] sm:$0xff]
      %v255 = vld [vmem:[%s234 + $0x28] sm:$0xff]
      %v256 = vld [vmem:[%s234 + $0x30] sm:$0xff]
      %v257 = vld [vmem:[%s234 + $0x38] sm:$0xff]
      %v258 = vld [vmem:[%s238] sm:$0xff]
      %260 = vset.pattern.permute.xlu0 0
      %261 = vperm.xlu0 %260, %v258
      %v262 = vpop.permute.xlu0 %261
      %vm264 = vcmask 523264
      %v266 = vsel %vm264, %v249, 0
      %268 = vmatprep.subr.mxu0 0.0
      %269 = vmatpush1.msra.mxu0 %v250
      %270 = vmatprep.subr.mxu0 0.0
      %271 = vmatpush1.msra.mxu0 %v251
      %272 = vmatprep.subr.mxu0 0.0
      %273 = vmatpush1.msra.mxu0 %v252
      %274 = vmatprep.subr.mxu0 0.0
      %275 = vmatpush1.msra.mxu0 %v253
      %276 = vmatprep.subr.mxu0 0.0
      %277 = vmatpush1.msra.mxu0 %v254
      %278 = vmatprep.subr.mxu0 0.0
      %279 = vmatpush1.msra.mxu0 %v255
      %280 = vmatprep.subr.mxu0 0.0
      %281 = vmatpush1.msra.mxu0 %v256
      %282 = vmatprep.subr.mxu0 0.0
      %283 = vmatpush1.msra.mxu0 %v257
      %284 = vmatprep.subr.mxu0 0.0
      %285 = vmatpush1.msra.mxu0 0.0
      %286 = vmatprep.subr.mxu0 0.0
      %287 = vmatpush1.msra.mxu0 0.0
      %288 = vmatprep.subr.mxu0 0.0
      %289 = vmatpush1.msra.mxu0 0.0
      %290 = vmatprep.subr.mxu0 0.0
      %291 = vmatpush1.msra.mxu0 0.0
      %292 = vmatprep.subr.mxu0 0.0
      %293 = vmatpush1.msra.mxu0 0.0
      %294 = vmatprep.subr.mxu0 0.0
      %295 = vmatpush1.msra.mxu0 0.0
      %296 = vmatprep.subr.mxu0 0.0
      %297 = vmatpush1.msra.mxu0 0.0
      %298 = vmatprep.subr.mxu0 0.0
      %299 = vmatpush1.msra.mxu0 0.0
      %300 = vmatprep.subr.mxu0 0.0
      %301 = vmatpush1.msra.mxu0 0.0
      %302 = vmatprep.subr.mxu0 0.0
      %303 = vmatpush1.msra.mxu0 0.0
      %304 = vmatprep.subr.mxu0 0.0
      %305 = vmatpush1.msra.mxu0 0.0
      %306 = vmatprep.subr.mxu0 0.0
      %307 = vmatpush1.msra.mxu0 0.0
      %308 = vmatprep.subr.mxu0 0.0
      %309 = vmatpush1.msra.mxu0 0.0
      %310 = vmatprep.subr.mxu0 0.0
      %311 = vmatpush1.msra.mxu0 0.0
      %312 = vmatprep.subr.mxu0 0.0
      %313 = vmatpush1.msra.mxu0 0.0
      %314 = vmatprep.subr.mxu0 0.0
      %315 = vmatpush1.msra.mxu0 0.0
      %316 = vmatprep.subr.mxu0 0.0
      %317 = vmatpush1.msra.mxu0 0.0
      %318 = vmatprep.subr.mxu0 0.0
      %319 = vmatpush1.msra.mxu0 0.0
      %320 = vmatprep.subr.mxu0 0.0
      %321 = vmatpush1.msra.mxu0 0.0
      %322 = vmatprep.subr.mxu0 0.0
      %323 = vmatpush1.msra.mxu0 0.0
      %324 = vmatprep.subr.mxu0 0.0
      %325 = vmatpush1.msra.mxu0 0.0
      %326 = vmatprep.subr.mxu0 0.0
      %327 = vmatpush1.msra.mxu0 0.0
      %328 = vmatprep.subr.mxu0 0.0
      %329 = vmatpush1.msra.mxu0 0.0
      %330 = vmatprep.subr.mxu0 0.0
      %331 = vmatpush1.msra.mxu0 0.0
      %332 = vmatprep.mubr.f32.mxu0 0.0
      %333 = vmatmul.mubr.f32.gmra.mrb[0].mxu0 %v266
      %v334 = vpop.f32.mrb[0].mxu0
      %v335 = vadd.f32 %v262, %v334
      %v336 = vpop.f32.mrb[0].mxu0
      %337 = vdwg.mxu0
      %vm338 = vcmp.ge.f32.partialorder %v335, 0.0
      %v339 = vmul.f32 %v335, 0.2
      %v340 = vsel %vm338, %v335, %v339
      %341 = vst [vmem:[%s248] sm:$0xff] %v340
      %p342 = scmp.lt.s32.totalorder %s19, 1
      %s343 = scalar_select %p342, %s19, 1
      %p344 = scmp.lt.s32.totalorder %s20, 0
      %s345 = scalar_select %p344, %s20, 0
      %p346 = scmp.lt.s32.totalorder %s21, 0
      %s347 = scalar_select %p346, %s21, 0
      %s348 = sadd.s32 %s347, %s345
      %s349 = sadd.s32 %s348, %s343
      %s350 = smul.addr %s349, 8
      %s351 = scalar_lea.vmem %s3, %s350
      // Predicated region
      $region33: #{conv_block.1} parent=31 // pred_check
        %p352 = pneg %p135
      $region34: #{conv_block.1} parent=31 // pred_check_branch
        %354 = sbr.rel (%p352) target = $region36
      $region35: #{conv_block.1} parent=31 // pred_region
        _
      $region36: #{conv_block.1} parent=31 // pred_fallthru
        _
    $region32: #{conv_block.1} parent=5 // pred_fallthru
      _
    %p355 = scmp.le.s32.totalorder 2, %s9
    // Predicated region
    $region37: #{conv_block.1} parent=5 // pred_check
      %p356 = pneg %p355
    $region38: #{conv_block.1} parent=5 // pred_check_branch
      %358 = sbr.rel (%p356) target = $region40
    $region39: #{conv_block.1} parent=5 // pred_region
      %s359 = ssub.s32 %s9, 2
      // Predicated region
      $region41: #{conv_block.1} parent=39 // pred_check
        %p360 = pneg %p141
      $region42: #{conv_block.1} parent=39 // pred_check_branch
        %362 = sbr.rel (%p360) target = $region44
      $region43: #{conv_block.1} parent=39 // pred_region
        %p363 = scmp.lt.s32.totalorder %s22, 1
        %s364 = scalar_select %p363, %s22, 1
        %p365 = scmp.lt.s32.totalorder %s23, 0
        %s366 = scalar_select %p365, %s23, 0
        %p367 = scmp.lt.s32.totalorder %s24, 0
        %s368 = scalar_select %p367, %s24, 0
        %s369 = sadd.s32 %s368, %s366
        %s370 = sadd.s32 %s369, %s364
        %s371 = smul.addr %s370, 8
        %s372 = scalar_lea.vmem %s3, %s371
      $region44: #{conv_block.1} parent=39 // pred_fallthru
        _
    $region40: #{conv_block.1} parent=5 // pred_fallthru
      _
  $region6: #{conv_block.1} parent=0 // loop_footer
    %s13 = sadd.s32 1, %s9
  $region7: #{conv_block.1} parent=0 // loop_footer_branch
    %8 = sbr.rel target = $region3
  $region8: #{conv_block.1} parent=0 // loop_exit
    _

</llo_original>
